<compile_context>
chip_gen: v6e
topology: v6e:2x2x1
jax: 0.10.0
libtpu: 0.0.40
codegen_flags: <defaults>
</compile_context>

<pallas_src>
import jax
import jax.numpy as jnp
from jax.experimental import pallas as pl
from jax.experimental.pallas import tpu as pltpu


# ---------------------------------------------------------------------------
# Kernels
# ---------------------------------------------------------------------------
def _passthrough_kernel(x_ref, o_ref):
    # Output is aliased to the input (input_output_aliases={0: 0}); its bytes
    # are already correct.  touch() pins a read+write dependency so the
    # aliased output is considered produced — zero HBM traffic, zero compute.
    del x_ref
    pltpu.touch(o_ref)


def _copy_kernel(x_ref, o_ref):
    # Fallback: straight lane-dense copy of one (1, S_blk, 768) tile.
    # 768 = 6*128 lanes -> unmasked vld/vst, no in-kernel relayout.
    o_ref[...] = x_ref[...]


# ---------------------------------------------------------------------------
# pallas_call wrappers
# ---------------------------------------------------------------------------
def _pick_s_block(S, target=96):
    """Largest multiple-of-8 divisor of S that is <= target (falls back to S)."""
    blk = min(S, target)
    blk -= blk % 8
    while blk >= 8:
        if S % blk == 0:
            return blk
        blk -= 8
    return S


def _passthrough_call(x):
    """Zero-traffic identity: output buffer IS the (donated) input buffer."""
    B, S, H = x.shape
    return pl.pallas_call(
        _passthrough_kernel,
        out_shape=jax.ShapeDtypeStruct((B, S, H), x.dtype),
        in_specs=[pl.BlockSpec(memory_space=pl.ANY)],
        out_specs=pl.BlockSpec(memory_space=pl.ANY),
        input_output_aliases={0: 0},
        compiler_params=pltpu.CompilerParams(has_side_effects=True),
    )(x)


def _copy_call(x):
    """Fallback: tiled, lane-dense identity copy (review's 2nd-order opts)."""
    B, S, H = x.shape
    s_blk = _pick_s_block(S)
    itemsize = x.dtype.itemsize

    if B == 1:
        # Drop the degenerate batch grid axis: clean 1-D "parallel" S grid.
        grid = (S // s_blk,)
        in_spec = pl.BlockSpec((1, s_blk, H), lambda i: (0, i, 0))
        out_spec = pl.BlockSpec((1, s_blk, H), lambda i: (0, i, 0))
        semantics = ("parallel",)
    else:
        grid = (B, S // s_blk)
        in_spec = pl.BlockSpec((1, s_blk, H), lambda b, i: (b, i, 0))
        out_spec = pl.BlockSpec((1, s_blk, H), lambda b, i: (b, i, 0))
        semantics = ("parallel", "parallel")

    return pl.pallas_call(
        _copy_kernel,
        out_shape=jax.ShapeDtypeStruct((B, S, H), x.dtype),
        grid=grid,
        in_specs=[in_spec],
        out_specs=out_spec,
        compiler_params=pltpu.CompilerParams(dimension_semantics=semantics),
        cost_estimate=pl.CostEstimate(
            flops=0, transcendentals=0, bytes_accessed=2 * B * S * H * itemsize),
    )(x)


# ---------------------------------------------------------------------------
# Module wrapper
# ---------------------------------------------------------------------------
def add_view(x164, x162, num_heads=12, head_dim=64):
    """Reproduces M.forward: x165 = x164 + (12, 64); return x162.view(x165)."""
    # TODO(synk): x164 is assumed to be a static Python tuple (as in the spec);
    # a traced array here would fail the tuple concat / shape assert.
    x165 = tuple(x164) + (num_heads, head_dim)   # operator.add on tuples
    B, S, H = x162.shape
    assert tuple(x164) == (B, S), "x164 must equal the leading dims of x162"
    assert H == num_heads * head_dim, "hidden dim must equal num_heads * head_dim"

    try:
        # Preferred: zero-traffic pass-through (output aliases the input).
        y = _passthrough_call(x162)
        y = jax.block_until_ready(y)
    except Exception:
        # Fallback: optimized lane-dense identity copy.
        y = _copy_call(x162)

    # Free, copy-less metadata change == torch .view on a contiguous tensor.
    return y.reshape(x165)


if __name__ == "__main__":
    key = jax.random.PRNGKey(0)
    # Shapes implied by the module: x162: (1, 384, 768), x164 = (1, 384)
    x162 = jax.random.normal(key, (1, 384, 768), dtype=jnp.float32)
    x164 = (1, 384)

    # Compute the reference BEFORE the call: the pass-through path donates the
    # x162 buffer via input_output_aliases, so x162 is not used afterwards.
    ref = jax.block_until_ready(x162.reshape(1, 384, 12, 64))

    out = add_view(x164, x162)
    out = jax.block_until_ready(out)

    assert out.shape == (1, 384, 12, 64)
    assert out.dtype == ref.dtype
    assert bool(jnp.array_equal(out, ref))

    print("KERNEL_OK")
</pallas_src>

<mosaic_0001>
module attributes {stable_mosaic.version = 11 : i64} {
  func.func @_passthrough_kernel(%arg0: memref<1x384x768xf32, #tpu.memory_space<any>>, %arg1: memref<1x384x768xf32, #tpu.memory_space<any>>) attributes {dimension_semantics = [], scalar_prefetch = 0 : i64, scratch_operands = 0 : i64, tpu.core_type = #tpu.core_type<tc>} {
    return
  }
}

module attributes {stable_mosaic.version = 11 : i64} {
  func.func @_copy_kernel(%arg0: i32, %arg1: memref<1x96x768xf32, #tpu.memory_space<vmem>>, %arg2: memref<1x96x768xf32, #tpu.memory_space<vmem>>) attributes {dimension_semantics = [#tpu.dimension_semantics<parallel>], iteration_bounds = array<i64: 4>, scalar_prefetch = 0 : i64, scratch_operands = 0 : i64, tpu.core_type = #tpu.core_type<tc>, window_params = [{transform_indices = @transform_0, window_bounds = array<i64: 1, 96, 768>}, {transform_indices = @transform_1, window_bounds = array<i64: 1, 96, 768>}]} {
    %c0 = arith.constant 0 : index
    %c0_0 = arith.constant 0 : index
    %c0_1 = arith.constant 0 : index
    %0 = vector.load %arg1[%c0, %c0_0, %c0_1] : memref<1x96x768xf32, #tpu.memory_space<vmem>>, vector<1x96x768xf32>
    %c0_2 = arith.constant 0 : index
    %c0_3 = arith.constant 0 : index
    %c0_4 = arith.constant 0 : index
    %1 = vector.load %arg2[%c0_2, %c0_3, %c0_4] : memref<1x96x768xf32, #tpu.memory_space<vmem>>, vector<1x96x768xf32>
    tpu.vector_store %arg2[%c0_2, %c0_3, %c0_4], %0 {strides = array<i32>} : memref<1x96x768xf32, #tpu.memory_space<vmem>>, vector<1x96x768xf32>,
    return
  }
  func.func @transform_0(%arg0: i32) -> (i32, i32, i32) {
    %c0_i32 = arith.constant 0 : i32
    %c0_i32_0 = arith.constant 0 : i32
    %c0_i32_1 = arith.constant 0 : i32
    return %c0_i32, %arg0, %c0_i32_0 : i32, i32, i32
  }
  func.func @transform_1(%arg0: i32) -> (i32, i32, i32) {
    %c0_i32 = arith.constant 0 : i32
    %c0_i32_0 = arith.constant 0 : i32
    %c0_i32_1 = arith.constant 0 : i32
    return %c0_i32, %arg0, %c0_i32_0 : i32, i32, i32
  }
}

</mosaic_0001>

<llo_original>
// kernel: tpu_custom_call.1
$region0: #{tpu_custom_call.1}
  #allocation0 [shape = 'u32[]', space=smem, size = 0x4, offset = 0x4, fixed_abs, tag = 'smem constant byte address 0x4 - core index']
  #allocation1 [shape = 'u32[144,128]{1,0:T(1,128)}', space=vmem, size = 0x12000, scoped, tag = 'internal scratch']
  %s0 = inlined_call_operand.hbm [shape: f32[1,384,768], index: 0, kind: input, shape index: {}, may-alias: {0,1}]
  %s1 = inlined_call_operand.hbm [shape: f32[1,384,768], index: 1, kind: output, shape index: {}, may-alias: {0,1}]
  %s2 = sld [smem:[#allocation0]]
  $region2: #{tpu_custom_call.1} parent=0
    _
  %s4 = ssub.s32 1, %s2
  %s5 = scalar_select 0, %s4, %s2

// kernel: tpu_custom_call.1
$region0: #{tpu_custom_call.1}
  #allocation0 [shape = 'u32[]', space=smem, size = 0x4, offset = 0x4, fixed_abs, tag = 'smem constant byte address 0x4 - core index']
  #allocation1 [shape = 'u32[144,128]{1,0:T(1,128)}', space=vmem, size = 0x12000, scoped, tag = 'internal scratch']
  %s0 = inlined_call_operand.hbm [shape: f32[1,384,768], index: 0, kind: input, shape index: {}]
  %s1 = inlined_call_operand.hbm [shape: f32[1,384,768], index: 1, kind: output, shape index: {}]
  %s2 = sld [smem:[#allocation0]]
  $region41: #{tpu_custom_call.1} parent=0
    _
  %s4 = ssub.s32 1, %s2
  %s5 = scalar_select 0, %s4, %s2
  $region1: #{tpu_custom_call.1} parent=0
    #allocation2 [shape = 'u8[589824]{0}', space=vmem, size = 0x90000, scoped, tag = 'input window, operand 0']
    #allocation3 [shape = 's32[2]{0}', space=sflag, size = 0x8, scoped, tag = 'scoped memory for tpu_custom_call.1']
    #allocation4 [shape = 's32[2]{0}', space=sflag, size = 0x8, scoped, tag = 'scoped memory for tpu_custom_call.1']
    #allocation5 [shape = 'u8[589824]{0}', space=vmem, size = 0x90000, scoped, tag = 'output window, operand 0']
    %6 = vsyncpa [#allocation3], 0
    %s7 = scalar_lea.sflag [#allocation3], 1
    %8 = vsyncpa %s7, 0
    %9 = vsyncpa [#allocation4], 0
    %s10 = scalar_lea.sflag [#allocation4], 1
    %11 = vsyncpa %s10, 0
    loop: start=0, step=1, limit=6
    $region2: #{tpu_custom_call.1} parent=1 // loop_pre_header
      _
    $region3: #{tpu_custom_call.1} parent=1 // loop_header
      %s13 = sphi 0, %s17
      %p14 = scmp.ge.s32.totalorder %s13, 6
      %s23 = sphi 0, %s25
      %s26 = sphi 0, %s23
      %s27 = sphi 0, %s26
      %s43 = sphi 0, %s27
      %s49 = sphi 0, %s51
      %s52 = sphi 0, %s49
      %s53 = sphi 0, %s52
      %s69 = sphi 0, %s53
    $region4: #{tpu_custom_call.1} parent=1 // loop_header_branch
      %16 = sbr.rel (%p14) target = $region8
    $region5: #{tpu_custom_call.1} parent=1 // loop_body
      %s18 = ssub.s32 %s13, 1
      %s19 = ssub.s32 %s13, 2
      %s20 = sadd.s32 %s13, 1
      %s21 = ssub.s32 %s13, %s20
      %p22 = scmp.eq.s32.totalorder %s21, 0
      %s24 = sadd.s32 %s23, 1
      %s25 = scalar_select %p22, %s23, %s24
      %p28 = pneg %p22
      %p29 = scmp.eq.s32.totalorder %s13, 3
      %p30 = por %p28, %p29
      %p31 = scmp.ne.s32.totalorder %s23, %s26
      %p32 = scmp.eq.s32.totalorder %s13, 0
      %p33 = por %p31, %p32
      %p34 = scmp.ne.s32.totalorder %s23, %s26
      %p35 = scmp.eq.s32.totalorder %s18, 3
      %p36 = por %p34, %p35
      %p37 = scmp.ne.s32.totalorder %s26, %s27
      %p38 = scmp.eq.s32.totalorder %s18, 0
      %p39 = por %p37, %p38
      %p40 = scmp.ne.s32.totalorder %s26, %s27
      %p41 = scmp.eq.s32.totalorder %s19, 3
      %p42 = por %p40, %p41
      %p44 = scmp.ne.s32.totalorder %s27, %s43
      %p45 = scmp.eq.s32.totalorder %s19, 0
      %p46 = por %p44, %p45
      %s47 = ssub.s32 %s13, %s20
      %p48 = scmp.eq.s32.totalorder %s47, 0
      %s50 = sadd.s32 %s49, 1
      %s51 = scalar_select %p48, %s49, %s50
      %p54 = pneg %p48
      %p55 = scmp.eq.s32.totalorder %s13, 3
      %p56 = por %p54, %p55
      %p57 = scmp.ne.s32.totalorder %s49, %s52
      %p58 = scmp.eq.s32.totalorder %s13, 0
      %p59 = por %p57, %p58
      %p60 = scmp.ne.s32.totalorder %s49, %s52
      %p61 = scmp.eq.s32.totalorder %s18, 3
      %p62 = por %p60, %p61
      %p63 = scmp.ne.s32.totalorder %s52, %s53
      %p64 = scmp.eq.s32.totalorder %s18, 0
      %p65 = por %p63, %p64
      %p66 = scmp.ne.s32.totalorder %s52, %s53
      %p67 = scmp.eq.s32.totalorder %s19, 3
      %p68 = por %p66, %p67
      %p70 = scmp.ne.s32.totalorder %s53, %s69
      %p71 = scmp.eq.s32.totalorder %s19, 0
      %p72 = por %p70, %p71
      %p73 = scmp.le.s32.totalorder 1, %s13
      %p74 = scmp.lt.s32.totalorder %s13, 5
      %p75 = pnand %p73, %p74
      %p76 = pneg %p75
      // Predicated region
      $region9: #{tpu_custom_call.1} parent=5 // pred_check
        _
      $region10: #{tpu_custom_call.1} parent=5 // pred_check_branch
        %78 = sbr.rel (%p75) target = $region12
      $region11: #{tpu_custom_call.1} parent=5 // pred_region
        %s79 = ssub.s32 %s13, 1
      $region12: #{tpu_custom_call.1} parent=5 // pred_fallthru
        _
      %p80 = scmp.lt.s32.totalorder %s13, 4
      // Predicated region
      $region13: #{tpu_custom_call.1} parent=5 // pred_check
        %p81 = pneg %p80
      $region14: #{tpu_custom_call.1} parent=5 // pred_check_branch
        %83 = sbr.rel (%p81) target = $region16
      $region15: #{tpu_custom_call.1} parent=5 // pred_region
        // Predicated region
        $region17: #{tpu_custom_call.1} parent=15 // pred_check
          %p84 = pneg %p33
        $region18: #{tpu_custom_call.1} parent=15 // pred_check_branch
          %86 = sbr.rel (%p84) target = $region20
        $region19: #{tpu_custom_call.1} parent=15 // pred_region
          %s87 = sand.u32 %s23, 1
          %s88 = scalar_lea.sflag [#allocation3], %s87
          %s89 = sand.u32 %s23, 1
          %s90 = smul.addr %s89, 576
          %s91 = scalar_lea.vmem [#allocation2], %s90
          %s92 = smul.u32 12, %s13
          %s94 = ssub.s32 9216, 9216
          %95 = vsyncadd %s88, %s94
          %s96 = smul.addr %s92, 6
          %s97 = smul.addr %s96, 128
          %s98 = scalar_lea.hbm %s0, %s97
          %s99 = sshll.u32 %s91, 4
          %s100 = int_to_ptr.vmem [resolvable:$true] %s99
          %105 = dma.hbm_to_vmem [thread:$0]  %s98, 9216, %s100, %s88, 768, 768, 48
        $region20: #{tpu_custom_call.1} parent=15 // pred_fallthru
          _
      $region16: #{tpu_custom_call.1} parent=5 // pred_fallthru
        _
      %p106 = scmp.le.s32.totalorder 1, %s13
      %p107 = scmp.lt.s32.totalorder %s13, 5
      %p108 = pnand %p106, %p107
      %p109 = pneg %p108
      // Predicated region
      $region21: #{tpu_custom_call.1} parent=5 // pred_check
        _
      $region22: #{tpu_custom_call.1} parent=5 // pred_check_branch
        %111 = sbr.rel (%p108) target = $region24
      $region23: #{tpu_custom_call.1} parent=5 // pred_region
        %s112 = ssub.s32 %s13, 1
        %s113 = sand.u32 %s26, 1
        %s114 = scalar_lea.sflag [#allocation3], %s113
        %s115 = sand.u32 %s26, 1
        %s116 = smul.addr %s115, 576
        %s117 = scalar_lea.vmem [#allocation2], %s116
        // Predicated region
        $region25: #{tpu_custom_call.1} parent=23 // pred_check
          %p118 = pneg %p39
        $region26: #{tpu_custom_call.1} parent=23 // pred_check_branch
          %120 = sbr.rel (%p118) target = $region28
        $region27: #{tpu_custom_call.1} parent=23 // pred_region
          %121 = dma.done %s114, 9216
        $region28: #{tpu_custom_call.1} parent=23 // pred_fallthru
          _
        %s122 = sand.u32 %s26, 1
        %s123 = scalar_lea.sflag [#allocation3], %s122
        %s124 = sand.u32 %s26, 1
        %s125 = smul.addr %s124, 576
        %s126 = scalar_lea.vmem [#allocation2], %s125
        %p127 = pneg %p39
        %p128 = pneg %p36
        %p129 = pneg %p65
        %p130 = pneg %p62
        %s131 = sand.u32 %s52, 1
        %s132 = scalar_lea.sflag [#allocation4], %s131
        %s133 = sand.u32 %s52, 1
        %s134 = smul.addr %s133, 576
        %s135 = scalar_lea.vmem [#allocation5], %s134
        %s136 = smul.u32 12, %s18
        %s137 = smul.u32 12, %s18
        %v138 = vld [vmem:[%s117] sm:$0xff]
        %v139 = vld [vmem:[%s117 + $0x8] sm:$0xff]
        %v140 = vld [vmem:[%s117 + $0x10] sm:$0xff]
        %v141 = vld [vmem:[%s117 + $0x18] sm:$0xff]
        %v142 = vld [vmem:[%s117 + $0x20] sm:$0xff]
        %v143 = vld [vmem:[%s117 + $0x28] sm:$0xff]
        %v144 = vld [vmem:[%s117 + $0x30] sm:$0xff]
        %v145 = vld [vmem:[%s117 + $0x38] sm:$0xff]
        %v146 = vld [vmem:[%s117 + $0x40] sm:$0xff]
        %v147 = vld [vmem:[%s117 + $0x48] sm:$0xff]
        %v148 = vld [vmem:[%s117 + $0x50] sm:$0xff]
        %v149 = vld [vmem:[%s117 + $0x58] sm:$0xff]
        %v150 = vld [vmem:[%s117 + $0x60] sm:$0xff]
        %v151 = vld [vmem:[%s117 + $0x68] sm:$0xff]
        %v152 = vld [vmem:[%s117 + $0x70] sm:$0xff]
        %v153 = vld [vmem:[%s117 + $0x78] sm:$0xff]
        %v154 = vld [vmem:[%s117 + $0x80] sm:$0xff]
        %v155 = vld [vmem:[%s117 + $0x88] sm:$0xff]
        %v156 = vld [vmem:[%s117 + $0x90] sm:$0xff]
        %v157 = vld [vmem:[%s117 + $0x98] sm:$0xff]
        %v158 = vld [vmem:[%s117 + $0xa0] sm:$0xff]
        %v159 = vld [vmem:[%s117 + $0xa8] sm:$0xff]
        %v160 = vld [vmem:[%s117 + $0xb0] sm:$0xff]
        %v161 = vld [vmem:[%s117 + $0xb8] sm:$0xff]
        %v162 = vld [vmem:[%s117 + $0xc0] sm:$0xff]
        %v163 = vld [vmem:[%s117 + $0xc8] sm:$0xff]
        %v164 = vld [vmem:[%s117 + $0xd0] sm:$0xff]
        %v165 = vld [vmem:[%s117 + $0xd8] sm:$0xff]
        %v166 = vld [vmem:[%s117 + $0xe0] sm:$0xff]
        %v167 = vld [vmem:[%s117 + $0xe8] sm:$0xff]
        %v168 = vld [vmem:[%s117 + $0xf0] sm:$0xff]
        %v169 = vld [vmem:[%s117 + $0xf8] sm:$0xff]
        %v170 = vld [vmem:[%s117 + $0x100] sm:$0xff]
        %v171 = vld [vmem:[%s117 + $0x108] sm:$0xff]
        %v172 = vld [vmem:[%s117 + $0x110] sm:$0xff]
        %v173 = vld [vmem:[%s117 + $0x118] sm:$0xff]
        %v174 = vld [vmem:[%s117 + $0x120] sm:$0xff]
        %v175 = vld [vmem:[%s117 + $0x128] sm:$0xff]
        %v176 = vld [vmem:[%s117 + $0x130] sm:$0xff]
        %v177 = vld [vmem:[%s117 + $0x138] sm:$0xff]
        %v178 = vld [vmem:[%s117 + $0x140] sm:$0xff]
        %v179 = vld [vmem:[%s117 + $0x148] sm:$0xff]
        %v180 = vld [vmem:[%s117 + $0x150] sm:$0xff]
        %v181 = vld [vmem:[%s117 + $0x158] sm:$0xff]
        %v182 = vld [vmem:[%s117 + $0x160] sm:$0xff]
        %v183 = vld [vmem:[%s117 + $0x168] sm:$0xff]
        %v184 = vld [vmem:[%s117 + $0x170] sm:$0xff]
        %v185 = vld [vmem:[%s117 + $0x178] sm:$0xff]
        %v186 = vld [vmem:[%s117 + $0x180] sm:$0xff]
        %v187 = vld [vmem:[%s117 + $0x188] sm:$0xff]
        %v188 = vld [vmem:[%s117 + $0x190] sm:$0xff]
        %v189 = vld [vmem:[%s117 + $0x198] sm:$0xff]
        %v190 = vld [vmem:[%s117 + $0x1a0] sm:$0xff]
        %v191 = vld [vmem:[%s117 + $0x1a8] sm:$0xff]
        %v192 = vld [vmem:[%s117 + $0x1b0] sm:$0xff]
        %v193 = vld [vmem:[%s117 + $0x1b8] sm:$0xff]
        %v194 = vld [vmem:[%s117 + $0x1c0] sm:$0xff]
        %v195 = vld [vmem:[%s117 + $0x1c8] sm:$0xff]
        %v196 = vld [vmem:[%s117 + $0x1d0] sm:$0xff]
        %v197 = vld [vmem:[%s117 + $0x1d8] sm:$0xff]
        %v198 = vld [vmem:[%s117 + $0x1e0] sm:$0xff]
        %v199 = vld [vmem:[%s117 + $0x1e8] sm:$0xff]
        %v200 = vld [vmem:[%s117 + $0x1f0] sm:$0xff]
        %v201 = vld [vmem:[%s117 + $0x1f8] sm:$0xff]
        %v202 = vld [vmem:[%s117 + $0x200] sm:$0xff]
        %v203 = vld [vmem:[%s117 + $0x208] sm:$0xff]
        %v204 = vld [vmem:[%s117 + $0x210] sm:$0xff]
        %v205 = vld [vmem:[%s117 + $0x218] sm:$0xff]
        %v206 = vld [vmem:[%s117 + $0x220] sm:$0xff]
        %v207 = vld [vmem:[%s117 + $0x228] sm:$0xff]
        %v208 = vld [vmem:[%s117 + $0x230] sm:$0xff]
        %v209 = vld [vmem:[%s117 + $0x238] sm:$0xff]
        %210 = vst [vmem:[%s135] sm:$0xff] %v138
        %211 = vst [vmem:[%s135 + $0x8] sm:$0xff] %v139
        %212 = vst [vmem:[%s135 + $0x10] sm:$0xff] %v140
        %213 = vst [vmem:[%s135 + $0x18] sm:$0xff] %v141
        %214 = vst [vmem:[%s135 + $0x20] sm:$0xff] %v142
        %215 = vst [vmem:[%s135 + $0x28] sm:$0xff] %v143
        %216 = vst [vmem:[%s135 + $0x30] sm:$0xff] %v144
        %217 = vst [vmem:[%s135 + $0x38] sm:$0xff] %v145
        %218 = vst [vmem:[%s135 + $0x40] sm:$0xff] %v146
        %219 = vst [vmem:[%s135 + $0x48] sm:$0xff] %v147
        %220 = vst [vmem:[%s135 + $0x50] sm:$0xff] %v148
        %221 = vst [vmem:[%s135 + $0x58] sm:$0xff] %v149
        %222 = vst [vmem:[%s135 + $0x60] sm:$0xff] %v150
        %223 = vst [vmem:[%s135 + $0x68] sm:$0xff] %v151
        %224 = vst [vmem:[%s135 + $0x70] sm:$0xff] %v152
        %225 = vst [vmem:[%s135 + $0x78] sm:$0xff] %v153
        %226 = vst [vmem:[%s135 + $0x80] sm:$0xff] %v154
        %227 = vst [vmem:[%s135 + $0x88] sm:$0xff] %v155
        %228 = vst [vmem:[%s135 + $0x90] sm:$0xff] %v156
        %229 = vst [vmem:[%s135 + $0x98] sm:$0xff] %v157
        %230 = vst [vmem:[%s135 + $0xa0] sm:$0xff] %v158
        %231 = vst [vmem:[%s135 + $0xa8] sm:$0xff] %v159
        %232 = vst [vmem:[%s135 + $0xb0] sm:$0xff] %v160
        %233 = vst [vmem:[%s135 + $0xb8] sm:$0xff] %v161
        %234 = vst [vmem:[%s135 + $0xc0] sm:$0xff] %v162
        %235 = vst [vmem:[%s135 + $0xc8] sm:$0xff] %v163
        %236 = vst [vmem:[%s135 + $0xd0] sm:$0xff] %v164
        %237 = vst [vmem:[%s135 + $0xd8] sm:$0xff] %v165
        %238 = vst [vmem:[%s135 + $0xe0] sm:$0xff] %v166
        %239 = vst [vmem:[%s135 + $0xe8] sm:$0xff] %v167
        %240 = vst [vmem:[%s135 + $0xf0] sm:$0xff] %v168
        %241 = vst [vmem:[%s135 + $0xf8] sm:$0xff] %v169
        %242 = vst [vmem:[%s135 + $0x100] sm:$0xff] %v170
        %243 = vst [vmem:[%s135 + $0x108] sm:$0xff] %v171
        %244 = vst [vmem:[%s135 + $0x110] sm:$0xff] %v172
        %245 = vst [vmem:[%s135 + $0x118] sm:$0xff] %v173
        %246 = vst [vmem:[%s135 + $0x120] sm:$0xff] %v174
        %247 = vst [vmem:[%s135 + $0x128] sm:$0xff] %v175
        %248 = vst [vmem:[%s135 + $0x130] sm:$0xff] %v176
        %249 = vst [vmem:[%s135 + $0x138] sm:$0xff] %v177
        %250 = vst [vmem:[%s135 + $0x140] sm:$0xff] %v178
        %251 = vst [vmem:[%s135 + $0x148] sm:$0xff] %v179
        %252 = vst [vmem:[%s135 + $0x150] sm:$0xff] %v180
        %253 = vst [vmem:[%s135 + $0x158] sm:$0xff] %v181
        %254 = vst [vmem:[%s135 + $0x160] sm:$0xff] %v182
        %255 = vst [vmem:[%s135 + $0x168] sm:$0xff] %v183
        %256 = vst [vmem:[%s135 + $0x170] sm:$0xff] %v184
        %257 = vst [vmem:[%s135 + $0x178] sm:$0xff] %v185
        %258 = vst [vmem:[%s135 + $0x180] sm:$0xff] %v186
        %259 = vst [vmem:[%s135 + $0x188] sm:$0xff] %v187
        %260 = vst [vmem:[%s135 + $0x190] sm:$0xff] %v188
        %261 = vst [vmem:[%s135 + $0x198] sm:$0xff] %v189
        %262 = vst [vmem:[%s135 + $0x1a0] sm:$0xff] %v190
        %263 = vst [vmem:[%s135 + $0x1a8] sm:$0xff] %v191
        %264 = vst [vmem:[%s135 + $0x1b0] sm:$0xff] %v192
        %265 = vst [vmem:[%s135 + $0x1b8] sm:$0xff] %v193
        %266 = vst [vmem:[%s135 + $0x1c0] sm:$0xff] %v194
        %267 = vst [vmem:[%s135 + $0x1c8] sm:$0xff] %v195
        %268 = vst [vmem:[%s135 + $0x1d0] sm:$0xff] %v196
        %269 = vst [vmem:[%s135 + $0x1d8] sm:$0xff] %v197
        %270 = vst [vmem:[%s135 + $0x1e0] sm:$0xff] %v198
        %271 = vst [vmem:[%s135 + $0x1e8] sm:$0xff] %v199
        %272 = vst [vmem:[%s135 + $0x1f0] sm:$0xff] %v200
        %273 = vst [vmem:[%s135 + $0x1f8] sm:$0xff] %v201
        %274 = vst [vmem:[%s135 + $0x200] sm:$0xff] %v202
        %275 = vst [vmem:[%s135 + $0x208] sm:$0xff] %v203
        %276 = vst [vmem:[%s135 + $0x210] sm:$0xff] %v204
        %277 = vst [vmem:[%s135 + $0x218] sm:$0xff] %v205
        %278 = vst [vmem:[%s135 + $0x220] sm:$0xff] %v206
        %279 = vst [vmem:[%s135 + $0x228] sm:$0xff] %v207
        %280 = vst [vmem:[%s135 + $0x230] sm:$0xff] %v208
        %281 = vst [vmem:[%s135 + $0x238] sm:$0xff] %v209
        %s282 = sand.u32 %s52, 1
        %s283 = scalar_lea.sflag [#allocation4], %s282
        %s284 = sand.u32 %s52, 1
        %s285 = smul.addr %s284, 576
        %s286 = scalar_lea.vmem [#allocation5], %s285
        // Predicated region
        $region29: #{tpu_custom_call.1} parent=23 // pred_check
          %p287 = pneg %p62
        $region30: #{tpu_custom_call.1} parent=23 // pred_check_branch
          %289 = sbr.rel (%p287) target = $region32
        $region31: #{tpu_custom_call.1} parent=23 // pred_region
          %s290 = smul.u32 12, %s18
          %s292 = ssub.s32 9216, 9216
          %293 = vsyncadd %s283, %s292
          %s294 = smul.addr %s290, 6
          %s295 = smul.addr %s294, 128
          %s296 = scalar_lea.hbm %s1, %s295
          %s297 = sshll.u32 %s286, 4
          %s298 = int_to_ptr.vmem [resolvable:$true] %s297
          %303 = dma.vmem_to_hbm [thread:$0]  %s298, 9216, %s296, %s283, 768, 768, 48
        $region32: #{tpu_custom_call.1} parent=23 // pred_fallthru
          _
      $region24: #{tpu_custom_call.1} parent=5 // pred_fallthru
        _
      %p304 = scmp.le.s32.totalorder 2, %s13
      // Predicated region
      $region33: #{tpu_custom_call.1} parent=5 // pred_check
        %p305 = pneg %p304
      $region34: #{tpu_custom_call.1} parent=5 // pred_check_branch
        %307 = sbr.rel (%p305) target = $region36
      $region35: #{tpu_custom_call.1} parent=5 // pred_region
        %s308 = ssub.s32 %s13, 2
        // Predicated region
        $region37: #{tpu_custom_call.1} parent=35 // pred_check
          %p309 = pneg %p68
        $region38: #{tpu_custom_call.1} parent=35 // pred_check_branch
          %311 = sbr.rel (%p309) target = $region40
        $region39: #{tpu_custom_call.1} parent=35 // pred_region
          %s312 = sand.u32 %s53, 1
          %s313 = scalar_lea.sflag [#allocation4], %s312
          %s314 = sand.u32 %s53, 1
          %s315 = smul.addr %s314, 576
          %s316 = scalar_lea.vmem [#allocation5], %s315
          %317 = dma.done %s313, 9216
        $region40: #{tpu_custom_call.1} parent=35 // pred_fallthru
          _
      $region36: #{tpu_custom_call.1} parent=5 // pred_fallthru
        _
    $region6: #{tpu_custom_call.1} parent=1 // loop_footer
      %s17 = sadd.s32 1, %s13
    $region7: #{tpu_custom_call.1} parent=1 // loop_footer_branch
      %12 = sbr.rel target = $region3
    $region8: #{tpu_custom_call.1} parent=1 // loop_exit
      _
    %318 = vsyncpa [#allocation3], 1
    %s319 = scalar_lea.sflag [#allocation3], 1
    %320 = vsyncpa %s319, 1
    %321 = vsyncpa [#allocation4], 1
    %s322 = scalar_lea.sflag [#allocation4], 1
    %323 = vsyncpa %s322, 1

</llo_original>
